<compile_context>
chip_gen: v7x
topology: tpu7x:2x2x1
jax: 0.10.0
libtpu: 0.0.40
codegen_flags: <defaults>
</compile_context>

<pallas_src>
import functools

import jax
import jax.numpy as jnp
from jax.experimental import pallas as pl
from jax.experimental.pallas import tpu as pltpu

_LANE = 512      # lane-dense last dim (multiple of 128 -> unmasked vector stores)
_SUB = 8         # sublane granularity


def _make_exp_decay_kernel(alpha, beta):
    """Build the elementwise kernel with alpha/beta folded in as constants."""
    alpha = float(alpha)
    beta = float(beta)
    one_minus_alpha = 1.0 - alpha

    def kernel(x_ref, prev_resp_ref, prev_state_ref, actv_ref, state_ref):
        updated_state = (prev_state_ref[...] * alpha
                         + prev_resp_ref[...] * one_minus_alpha)
        new_actv = jnp.maximum(x_ref[...] - beta * updated_state, 0.0)
        actv_ref[...] = new_actv          # new_actv (== x_out, returned twice)
        state_ref[...] = updated_state    # updated_state

    return kernel


@functools.partial(jax.jit, static_argnums=(3, 4), static_argnames=("block_rows",))
def exponential_decay_forward(x, previous_response, previous_state, alpha, beta,
                              *, block_rows=512):
    """Elementwise ExponentialDecay forward. x / prev_* are NCHW tensors."""
    orig_shape = x.shape
    dtype = x.dtype
    n = x.size

    # Pad only to a lane multiple (not a block multiple); skip entirely if aligned.
    n_pad = -(-n // _LANE) * _LANE

    def to_slab(a):
        a = a.reshape(-1).astype(dtype)
        if n_pad != n:
            a = jnp.pad(a, (0, n_pad - n))
        return a.reshape(-1, _LANE)

    x2 = to_slab(x)
    pr2 = to_slab(previous_response)
    ps2 = to_slab(previous_state)

    rows = x2.shape[0]
    if rows <= block_rows:
        br = rows                                   # whole array in one block
    else:
        br = max(_SUB, (block_rows // _SUB) * _SUB)  # 8-aligned tile

    grid = (pl.cdiv(rows, br),)                      # Pallas masks the ragged tail
    data_spec = pl.BlockSpec((br, _LANE), lambda i: (i, 0))
    out_shape = jax.ShapeDtypeStruct((rows, _LANE), dtype)

    new_actv, updated_state = pl.pallas_call(
        _make_exp_decay_kernel(alpha, beta),
        grid=grid,
        in_specs=[data_spec, data_spec, data_spec],
        out_specs=(data_spec, data_spec),
        out_shape=(out_shape, out_shape),
        compiler_params=pltpu.CompilerParams(
            dimension_semantics=("parallel",)),
    )(x2, pr2, ps2)

    def from_slab(a):
        if n_pad != n:
            a = a.reshape(-1)[:n]
        return a.reshape(orig_shape)

    new_actv = from_slab(new_actv)
    updated_state = from_slab(updated_state)
    # x_out is new_actv: PyTorch's .clone() is moot for immutable JAX arrays.
    return new_actv, new_actv, updated_state


def exponential_decay_ref(x, previous_response, previous_state, alpha, beta):
    updated_state = previous_state * alpha + previous_response * (1.0 - alpha)
    new_actv = jnp.maximum(x - beta * updated_state, 0.0)
    return new_actv, new_actv, updated_state


if __name__ == "__main__":
    alpha_init = 0.9
    beta_init = 0.5

    key = jax.random.PRNGKey(0)

    # Case 1: lane-aligned NCHW shape (no padding path).
    k1, k2, k3, k4, k5, k6 = jax.random.split(key, 6)
    shape = (2, 4, 16, 16)  # NCHW, 2048 elements -> exactly 4 rows of 512 lanes
    x = jax.random.normal(k1, shape, dtype=jnp.float32)
    prev_resp = jax.random.normal(k2, shape, dtype=jnp.float32)
    prev_state = jax.random.normal(k3, shape, dtype=jnp.float32)

    x_out, new_actv, updated_state = exponential_decay_forward(
        x, prev_resp, prev_state, alpha_init, beta_init)
    jax.block_until_ready((x_out, new_actv, updated_state))

    r_out, r_actv, r_state = exponential_decay_ref(
        x, prev_resp, prev_state, alpha_init, beta_init)
    assert jnp.allclose(x_out, r_out, atol=1e-6)
    assert jnp.allclose(new_actv, r_actv, atol=1e-6)
    assert jnp.allclose(updated_state, r_state, atol=1e-6)

    # Case 2: non-lane-aligned shape (exercises the padding + masked-tail path).
    shape2 = (2, 3, 7, 5)  # 210 elements -> padded to 512
    x_b = jax.random.normal(k4, shape2, dtype=jnp.float32)
    pr_b = jax.random.normal(k5, shape2, dtype=jnp.float32)
    ps_b = jax.random.normal(k6, shape2, dtype=jnp.float32)

    xo_b, na_b, us_b = exponential_decay_forward(
        x_b, pr_b, ps_b, alpha_init, beta_init)
    jax.block_until_ready((xo_b, na_b, us_b))

    ro_b, ra_b, rs_b = exponential_decay_ref(x_b, pr_b, ps_b, alpha_init, beta_init)
    assert jnp.allclose(xo_b, ro_b, atol=1e-6)
    assert jnp.allclose(na_b, ra_b, atol=1e-6)
    assert jnp.allclose(us_b, rs_b, atol=1e-6)

    print("KERNEL_OK")
</pallas_src>

<mosaic_0001>
module attributes {stable_mosaic.version = 11 : i64} {
  func.func @kernel(%arg0: i32, %arg1: memref<4x512xf32, #tpu.memory_space<vmem>>, %arg2: memref<4x512xf32, #tpu.memory_space<vmem>>, %arg3: memref<4x512xf32, #tpu.memory_space<vmem>>, %arg4: memref<4x512xf32, #tpu.memory_space<vmem>>, %arg5: memref<4x512xf32, #tpu.memory_space<vmem>>) attributes {dimension_semantics = [#tpu.dimension_semantics<parallel>], iteration_bounds = array<i64: 1>, scalar_prefetch = 0 : i64, scratch_operands = 0 : i64, tpu.core_type = #tpu.core_type<tc>, window_params = [{transform_indices = @transform_0, window_bounds = array<i64: 4, 512>}, {transform_indices = @transform_1, window_bounds = array<i64: 4, 512>}, {transform_indices = @transform_2, window_bounds = array<i64: 4, 512>}, {transform_indices = @transform_3, window_bounds = array<i64: 4, 512>}, {transform_indices = @transform_4, window_bounds = array<i64: 4, 512>}]} {
    %c0 = arith.constant 0 : index
    %c0_0 = arith.constant 0 : index
    %0 = vector.load %arg3[%c0, %c0_0] : memref<4x512xf32, #tpu.memory_space<vmem>>, vector<4x512xf32>
    %cst = arith.constant 0.899999976 : f32
    %1 = vector.broadcast %cst : f32 to vector<4x512xf32>
    %2 = arith.mulf %0, %1 : vector<4x512xf32>
    %c0_1 = arith.constant 0 : index
    %c0_2 = arith.constant 0 : index
    %3 = vector.load %arg2[%c0_1, %c0_2] : memref<4x512xf32, #tpu.memory_space<vmem>>, vector<4x512xf32>
    %cst_3 = arith.constant 1.000000e-01 : f32
    %4 = vector.broadcast %cst_3 : f32 to vector<4x512xf32>
    %5 = arith.mulf %3, %4 : vector<4x512xf32>
    %6 = arith.addf %2, %5 : vector<4x512xf32>
    %c0_4 = arith.constant 0 : index
    %c0_5 = arith.constant 0 : index
    %7 = vector.load %arg1[%c0_4, %c0_5] : memref<4x512xf32, #tpu.memory_space<vmem>>, vector<4x512xf32>
    %cst_6 = arith.constant 5.000000e-01 : f32
    %8 = vector.broadcast %cst_6 : f32 to vector<4x512xf32>
    %9 = arith.mulf %8, %6 : vector<4x512xf32>
    %10 = arith.subf %7, %9 : vector<4x512xf32>
    %cst_7 = arith.constant 0.000000e+00 : f32
    %11 = vector.broadcast %cst_7 : f32 to vector<4x512xf32>
    %12 = arith.maximumf %10, %11 : vector<4x512xf32>
    %c0_8 = arith.constant 0 : index
    %c0_9 = arith.constant 0 : index
    %13 = vector.load %arg4[%c0_8, %c0_9] : memref<4x512xf32, #tpu.memory_space<vmem>>, vector<4x512xf32>
    tpu.vector_store %arg4[%c0_8, %c0_9], %12 {strides = array<i32>} : memref<4x512xf32, #tpu.memory_space<vmem>>, vector<4x512xf32>,
    %c0_10 = arith.constant 0 : index
    %c0_11 = arith.constant 0 : index
    %14 = vector.load %arg5[%c0_10, %c0_11] : memref<4x512xf32, #tpu.memory_space<vmem>>, vector<4x512xf32>
    tpu.vector_store %arg5[%c0_10, %c0_11], %6 {strides = array<i32>} : memref<4x512xf32, #tpu.memory_space<vmem>>, vector<4x512xf32>,
    return
  }
  func.func @transform_0(%arg0: i32) -> (i32, i32) {
    %c0_i32 = arith.constant 0 : i32
    %c0_i32_0 = arith.constant 0 : i32
    return %arg0, %c0_i32 : i32, i32
  }
  func.func @transform_1(%arg0: i32) -> (i32, i32) {
    %c0_i32 = arith.constant 0 : i32
    %c0_i32_0 = arith.constant 0 : i32
    return %arg0, %c0_i32 : i32, i32
  }
  func.func @transform_2(%arg0: i32) -> (i32, i32) {
    %c0_i32 = arith.constant 0 : i32
    %c0_i32_0 = arith.constant 0 : i32
    return %arg0, %c0_i32 : i32, i32
  }
  func.func @transform_3(%arg0: i32) -> (i32, i32) {
    %c0_i32 = arith.constant 0 : i32
    %c0_i32_0 = arith.constant 0 : i32
    return %arg0, %c0_i32 : i32, i32
  }
  func.func @transform_4(%arg0: i32) -> (i32, i32) {
    %c0_i32 = arith.constant 0 : i32
    %c0_i32_0 = arith.constant 0 : i32
    return %arg0, %c0_i32 : i32, i32
  }
}

</mosaic_0001>

<llo_original>
// kernel: exponential_decay_forward.1
$region0: #{exponential_decay_forward.1}
  #allocation0 [shape = 'u32[]', space=smem, size = 0x4, offset = 0x4, fixed_abs, tag = 'smem constant byte address 0x4 - core index']
  #allocation1 [shape = 'u32[144,128]{1,0:T(1,128)}', space=vmem, size = 0x12000, scoped, tag = 'internal scratch']
  %s0 = inlined_call_operand.vmem [shape: f32[4,512], index: 0, kind: input, shape index: {}]
  %s1 = inlined_call_operand.vmem [shape: f32[4,512], index: 1, kind: input, shape index: {}]
  %s2 = inlined_call_operand.vmem [shape: f32[4,512], index: 2, kind: input, shape index: {}]
  %s3 = inlined_call_operand.vmem [shape: f32[4,512], index: 3, kind: output, shape index: {0}]
  %s4 = inlined_call_operand.vmem [shape: f32[4,512], index: 4, kind: output, shape index: {1}]
  %5 = xla_tuple %s3, %s4
  %s6 = sld [smem:[#allocation0]]
  $region30: #{exponential_decay_forward.1} parent=0
    _
  %s8 = ssub.s32 1, %s6
  %s9 = scalar_select 0, %s8, %s6
  // Predicated region
  $region2: #{exponential_decay_forward.1} parent=0 // pred_check
    _
  $region3: #{exponential_decay_forward.1} parent=0 // pred_check_branch
    %11 = sbr.rel (0) target = $region5
  $region4: #{exponential_decay_forward.1} parent=0 // pred_region
    _
  $region5: #{exponential_decay_forward.1} parent=0 // pred_fallthru
    _
  // Predicated region
  $region6: #{exponential_decay_forward.1} parent=0 // pred_check
    _
  $region7: #{exponential_decay_forward.1} parent=0 // pred_check_branch
    %13 = sbr.rel (0) target = $region9
  $region8: #{exponential_decay_forward.1} parent=0 // pred_region
    _
  $region9: #{exponential_decay_forward.1} parent=0 // pred_fallthru
    _
  // Predicated region
  $region10: #{exponential_decay_forward.1} parent=0 // pred_check
    _
  $region11: #{exponential_decay_forward.1} parent=0 // pred_check_branch
    %15 = sbr.rel (0) target = $region13
  $region12: #{exponential_decay_forward.1} parent=0 // pred_region
    _
  $region13: #{exponential_decay_forward.1} parent=0 // pred_fallthru
    _
  %v16 = vld [vmem:[%s2] sm:$0xff]
  %v17 = vld [vmem:[%s2 + $0x8] sm:$0xff]
  %v18 = vmul.f32 %v16, 0.9
  %v19 = vmul.f32 %v17, 0.9
  %v20 = vld [vmem:[%s1] sm:$0xff]
  %v21 = vld [vmem:[%s1 + $0x8] sm:$0xff]
  %v22 = vmul.f32 %v20, 0.1
  %v23 = vmul.f32 %v21, 0.1
  %v24 = vadd.f32 %v18, %v22
  %v25 = vadd.f32 %v19, %v23
  %v26 = vld [vmem:[%s0] sm:$0xff]
  %v27 = vld [vmem:[%s0 + $0x8] sm:$0xff]
  %v28 = vmul.f32 %v24, 0.5
  %v29 = vmul.f32 %v25, 0.5
  %v30 = vsub.f32 %v26, %v28
  %v31 = vsub.f32 %v27, %v29
  %v32 = vmax.f32 %v30, 0.0
  %v33 = vmax.f32 %v31, 0.0
  %34 = vst [vmem:[%s3] sm:$0xff] %v32
  %35 = vst [vmem:[%s3 + $0x8] sm:$0xff] %v33
  %36 = vst [vmem:[%s4] sm:$0xff] %v24
  %37 = vst [vmem:[%s4 + $0x8] sm:$0xff] %v25
  // Predicated region
  $region14: #{exponential_decay_forward.1} parent=0 // pred_check
    _
  $region15: #{exponential_decay_forward.1} parent=0 // pred_check_branch
    %39 = sbr.rel (0) target = $region17
  $region16: #{exponential_decay_forward.1} parent=0 // pred_region
    _
  $region17: #{exponential_decay_forward.1} parent=0 // pred_fallthru
    _
  // Predicated region
  $region18: #{exponential_decay_forward.1} parent=0 // pred_check
    _
  $region19: #{exponential_decay_forward.1} parent=0 // pred_check_branch
    %41 = sbr.rel (0) target = $region21
  $region20: #{exponential_decay_forward.1} parent=0 // pred_region
    _
  $region21: #{exponential_decay_forward.1} parent=0 // pred_fallthru
    _
  // Predicated region
  $region22: #{exponential_decay_forward.1} parent=0 // pred_check
    _
  $region23: #{exponential_decay_forward.1} parent=0 // pred_check_branch
    %43 = sbr.rel (0) target = $region25
  $region24: #{exponential_decay_forward.1} parent=0 // pred_region
    _
  $region25: #{exponential_decay_forward.1} parent=0 // pred_fallthru
    _
  // Predicated region
  $region26: #{exponential_decay_forward.1} parent=0 // pred_check
    _
  $region27: #{exponential_decay_forward.1} parent=0 // pred_check_branch
    %45 = sbr.rel (0) target = $region29
  $region28: #{exponential_decay_forward.1} parent=0 // pred_region
    _
  $region29: #{exponential_decay_forward.1} parent=0 // pred_fallthru
    _

</llo_original>
